<compile_context>
chip_gen: v7x
topology: tpu7x:2x2x1
jax: 0.10.0
libtpu: 0.0.40
codegen_flags: <defaults>
</compile_context>

<pallas_src>
import math

import jax
import jax.numpy as jnp
from jax import lax
from jax.experimental import pallas as pl
from jax.experimental.pallas import tpu as pltpu

OBS_DIM = 12
ACT_DIM = 4
HIDDEN = (32, 32)            # fused path assumes HIDDEN[0] == HIDDEN[1]
BATCH = 8
LN_EPS = 1e-5

H = HIDDEN[0]                # 32
W_FUSED = 2 * H              # 64 lanes: critic-1 in [0:32), critic-2 in [32:64)
D_IN = OBS_DIM + ACT_DIM     # 16

# w_slab row layout (all offsets are multiples of 8 -> aligned f32 sublane slices):
W1_OFF = 0                   # rows   0: 16  fused layer-1 weights      (16, 64)
W2_OFF = W1_OFF + D_IN       # rows  16: 80  block-diag layer-2 weights (64, 64)
S_OFF = W2_OFF + W_FUSED     # rows  80:144  block-averaging matrix S   (64, 64)
W3_OFF = S_OFF + W_FUSED     # rows 144:208  head weights (cols 0/1)    (64, 64)
W_ROWS = W3_OFF + W_FUSED    # 208

# p_slab rows (8 x 64 f32):
#   0: b1   1: gamma1   2: beta1   3: b2   4: gamma2   5: beta2
#   6: head biases (critic1 b3 in lane 0, critic2 b3 in lane 1)   7: padding


# ----------------------------- kernel ---------------------------------------

def _fused_layernorm(h, s_mat, gamma, beta):
    """Per-critic LayerNorm over lanes [0:32) and [32:64) with NO XLU work.

    The segmented lane reductions run on the (otherwise idle) MXU: multiplying
    by the block-averaging matrix S returns mean / E[h^2] already broadcast
    across each critic's 32 lanes.  One-pass variance (E[h^2] - mean^2),
    matching PyTorch LayerNorm's biased variance.
    """
    mean = jnp.dot(h, s_mat, preferred_element_type=jnp.float32)
    msq = jnp.dot(h * h, s_mat, preferred_element_type=jnp.float32)
    var = msq - mean * mean
    return (h - mean) * lax.rsqrt(var + LN_EPS) * gamma + beta


def doubleq_kernel(x_ref, w_ref, p_ref, out_ref):
    # x_ref  : (TB, 16)  f32
    # w_ref  : (208, 64) f32  -- layout above (W1 / block-diag W2 / S / W3)
    # p_ref  : (8, 64)   f32  -- biases / LN params / head biases
    # out_ref: (TB, 2)   f32  -- lane 0 = q1, lane 1 = q2
    x = x_ref[...]

    w1 = w_ref[W1_OFF:W1_OFF + D_IN, :]            # (16, 64)
    w2 = w_ref[W2_OFF:W2_OFF + W_FUSED, :]         # (64, 64) block-diagonal
    s_mat = w_ref[S_OFF:S_OFF + W_FUSED, :]        # (64, 64) averaging matrix
    w3 = w_ref[W3_OFF:W3_OFF + W_FUSED, :]         # (64, 64), cols 0/1 live

    b1, g1, be1 = p_ref[0:1, :], p_ref[1:2, :], p_ref[2:3, :]
    b2, g2, be2 = p_ref[3:4, :], p_ref[4:5, :], p_ref[5:6, :]
    b3 = p_ref[6:7, 0:2]                           # (1, 2)

    # Layer 1: fused Linear for both critics (single MXU pass, f32 operands).
    h = jnp.dot(x, w1, preferred_element_type=jnp.float32) + b1
    h = jnp.maximum(_fused_layernorm(h, s_mat, g1, be1), 0.0)   # LN + ReLU

    # Layer 2: block-diagonal fused Linear (critics remain independent).
    h = jnp.dot(h, w2, preferred_element_type=jnp.float32) + b2
    h = jnp.maximum(_fused_layernorm(h, s_mat, g2, be2), 0.0)

    # Heads: one MXU pass; columns 0/1 of the result are q1/q2.
    q = jnp.dot(h, w3, preferred_element_type=jnp.float32)      # (TB, 64)
    out_ref[...] = q[:, 0:2] + b3


# ----------------------------- wrapper ---------------------------------------

def pack_params(p1, p2):
    """Fuse & pack both critics' parameters into two f32 DMA-friendly slabs.

    Done once at parameter-setup time (not per forward call).
    """
    (w1a, b1a, g1a, be1a, w2a, b2a, g2a, be2a, w3a, b3a) = p1
    (w1b, b1b, g1b, be1b, w2b, b2b, g2b, be2b, w3b, b3b) = p2
    # The PyTorch module's trailing LayerNorm uses hidden_dims[0]; the fused
    # lane layout also assumes equal hidden widths -> fail loudly otherwise.
    assert HIDDEN[0] == HIDDEN[1], "fused DoubleQ path needs equal hidden dims"

    w1_f = jnp.concatenate([w1a, w1b], axis=1)                     # (16, 64)
    w2_f = jnp.zeros((W_FUSED, W_FUSED), jnp.float32)
    w2_f = w2_f.at[:H, :H].set(w2a).at[H:, H:].set(w2b)            # (64, 64)
    # Block-averaging matrix for the segmented LayerNorm statistics.
    s_f = jnp.zeros((W_FUSED, W_FUSED), jnp.float32)
    s_f = s_f.at[:H, :H].set(1.0 / H).at[H:, H:].set(1.0 / H)      # (64, 64)
    # Head weights: critic-1 w3 in column 0 (rows 0:32), critic-2 in column 1.
    w3_f = jnp.zeros((W_FUSED, W_FUSED), jnp.float32)
    w3_f = w3_f.at[:H, 0].set(w3a[:, 0]).at[H:, 1].set(w3b[:, 0])  # (64, 64)
    w_slab = jnp.concatenate([w1_f, w2_f, s_f, w3_f], axis=0)      # (208, 64)

    cat = lambda a, b: jnp.concatenate([a, b], axis=1)             # (1, 64)
    b3_row = jnp.zeros((1, W_FUSED), jnp.float32)
    b3_row = b3_row.at[0, 0].set(b3a[0, 0]).at[0, 1].set(b3b[0, 0])
    p_slab = jnp.concatenate(
        [cat(b1a, b1b), cat(g1a, g1b), cat(be1a, be1b),
         cat(b2a, b2b), cat(g2a, g2b), cat(be2a, be2b),
         b3_row, jnp.zeros((1, W_FUSED), jnp.float32)], axis=0)    # (8, 64)
    return w_slab, p_slab


def doubleq_forward(x, w_slab, p_slab, *, batch_tile=None):
    B = x.shape[0]
    # Batch tile: multiple of 8 (f32 sublanes) or the full batch.  grid=(1,)
    # at B=8 (same cost as grid=()), parallel tiles across TCs for big batches.
    tb = batch_tile if batch_tile is not None else (B if B <= 128 else 128)
    grid = (pl.cdiv(B, tb),)
    # TODO(synk): fuse adjacent training-step math (e.g. min(q1,q2), Bellman
    # target) into this kernel at the call site to amortize launch/DMA latency.
    out = pl.pallas_call(
        doubleq_kernel,
        grid=grid,
        in_specs=[
            pl.BlockSpec((tb, D_IN), lambda i: (i, 0)),
            pl.BlockSpec(w_slab.shape, lambda i: (0, 0)),
            pl.BlockSpec(p_slab.shape, lambda i: (0, 0)),
        ],
        out_specs=pl.BlockSpec((tb, 2), lambda i: (i, 0)),
        out_shape=jax.ShapeDtypeStruct((B, 2), jnp.float32),
        compiler_params=pltpu.CompilerParams(
            dimension_semantics=("parallel",)),
    )(x, w_slab, p_slab)
    # DoubleQ.forward returns a tuple (q1, q2), each (B, 1).
    return out[:, 0:1], out[:, 1:2]


# --------------- deterministic parameter init (PyTorch nn.Linear style) ------

def _linear_params(key, fan_in, fan_out):
    kw, kb = jax.random.split(key)
    bound = 1.0 / math.sqrt(fan_in)
    w = jax.random.uniform(kw, (fan_in, fan_out), jnp.float32, -bound, bound)
    b = jax.random.uniform(kb, (1, fan_out), jnp.float32, -bound, bound)
    return w, b


def _critic_params(key):
    k1, k2, k3 = jax.random.split(key, 3)
    w1, b1 = _linear_params(k1, D_IN, HIDDEN[0])
    g1 = jnp.ones((1, HIDDEN[0]), jnp.float32)
    be1 = jnp.zeros((1, HIDDEN[0]), jnp.float32)
    w2, b2 = _linear_params(k2, HIDDEN[0], HIDDEN[1])
    # The PyTorch module builds the trailing LayerNorm as LayerNorm(hidden_dims[i-1]);
    # correct here because HIDDEN[0] == HIDDEN[1] (asserted in pack_params).
    g2 = jnp.ones((1, HIDDEN[0]), jnp.float32)
    be2 = jnp.zeros((1, HIDDEN[0]), jnp.float32)
    w3, b3 = _linear_params(k3, HIDDEN[1], 1)
    return (w1, b1, g1, be1, w2, b2, g2, be2, w3, b3)


# ----------------------------- pure-JAX references ---------------------------

def _ln_ref(h, gamma, beta):
    mean = jnp.mean(h, axis=-1, keepdims=True)
    var = jnp.mean((h - mean) ** 2, axis=-1, keepdims=True)   # biased, two-pass
    return (h - mean) * lax.rsqrt(var + LN_EPS) * gamma + beta


def _critic_ref(x, p, operand_dtype=jnp.float32):
    """Pure-JAX reference on the UNPACKED per-critic params.

    operand_dtype=float32 gives the exact module semantics; bfloat16 mirrors a
    matmul policy that rounds operands to bf16 (accumulation stays f32).
    """
    (w1, b1, g1, be1, w2, b2, g2, be2, w3, b3) = p
    dot = lambda a, w: jnp.dot(a.astype(operand_dtype), w.astype(operand_dtype),
                               preferred_element_type=jnp.float32,
                               precision=jax.lax.Precision.HIGHEST)
    h = dot(x, w1) + b1
    h = jnp.maximum(_ln_ref(h, g1, be1), 0.0)
    h = dot(h, w2) + b2
    h = jnp.maximum(_ln_ref(h, g2, be2), 0.0)
    return dot(h, w3) + b3


if __name__ == "__main__":
    key = jax.random.PRNGKey(0)
    kx, kq1, kq2 = jax.random.split(key, 3)

    x = jax.random.normal(kx, (BATCH, D_IN), jnp.float32)
    p1 = _critic_params(kq1)
    p2 = _critic_params(kq2)
    w_slab, p_slab = pack_params(p1, p2)   # one-time packing, outside the kernel

    q1, q2 = doubleq_forward(x, w_slab, p_slab)
    jax.block_until_ready((q1, q2))
    assert q1.shape == (BATCH, 1) and q2.shape == (BATCH, 1)

    # Exact f32 module semantics (highest-precision reference matmuls).
    r1 = _critic_ref(x, p1, jnp.float32)
    r2 = _critic_ref(x, p2, jnp.float32)
    # bf16-operand mirror reference (only relevant if the platform's matmul
    # policy rounds f32 MXU operands to bf16).
    m1 = _critic_ref(x, p1, jnp.bfloat16)
    m2 = _critic_ref(x, p2, jnp.bfloat16)

    # Primary check: the kernel keeps every matmul operand in f32, so it is
    # expected to match the exact reference to ~1e-5; the fallback band only
    # covers a reduced-precision (bf16-operand) matmul policy, mirrored by m*.
    ok1 = bool(jnp.allclose(q1, r1, atol=1e-3)) or bool(jnp.allclose(q1, m1, atol=5e-2))
    ok2 = bool(jnp.allclose(q2, r2, atol=1e-3)) or bool(jnp.allclose(q2, m2, atol=5e-2))
    assert ok1, "q1 mismatch vs reference"
    assert ok2, "q2 mismatch vs reference"

    # Coarse sanity band vs. exact f32 semantics (always holds).
    assert jnp.allclose(q1, r1, atol=0.25), "q1 drift vs f32 reference too large"
    assert jnp.allclose(q2, r2, atol=0.25), "q2 drift vs f32 reference too large"

    print("KERNEL_OK")
</pallas_src>

<mosaic_0001>
module attributes {stable_mosaic.version = 11 : i64} {
  func.func @doubleq_kernel(%arg0: i32, %arg1: memref<8x16xf32, #tpu.memory_space<vmem>>, %arg2: memref<208x64xf32, #tpu.memory_space<vmem>>, %arg3: memref<8x64xf32, #tpu.memory_space<vmem>>, %arg4: memref<8x2xf32, #tpu.memory_space<vmem>>) attributes {dimension_semantics = [#tpu.dimension_semantics<parallel>], iteration_bounds = array<i64: 1>, scalar_prefetch = 0 : i64, scratch_operands = 0 : i64, tpu.core_type = #tpu.core_type<tc>, window_params = [{transform_indices = @transform_0, window_bounds = array<i64: 8, 16>}, {pipeline_mode = #tpu.pipeline_mode<synchronous>, transform_indices = @transform_1, window_bounds = array<i64: 208, 64>}, {pipeline_mode = #tpu.pipeline_mode<synchronous>, transform_indices = @transform_2, window_bounds = array<i64: 8, 64>}, {transform_indices = @transform_3, window_bounds = array<i64: 8, 2>}]} {
    %c0 = arith.constant 0 : index
    %c0_0 = arith.constant 0 : index
    %0 = vector.load %arg1[%c0, %c0_0] : memref<8x16xf32, #tpu.memory_space<vmem>>, vector<8x16xf32>
    %c0_1 = arith.constant 0 : index
    %c0_2 = arith.constant 0 : index
    %1 = vector.load %arg2[%c0_1, %c0_2] : memref<208x64xf32, #tpu.memory_space<vmem>>, vector<16x64xf32>
    %c16 = arith.constant 16 : index
    %c0_3 = arith.constant 0 : index
    %2 = vector.load %arg2[%c16, %c0_3] : memref<208x64xf32, #tpu.memory_space<vmem>>, vector<64x64xf32>
    %c80 = arith.constant 80 : index
    %c0_4 = arith.constant 0 : index
    %3 = vector.load %arg2[%c80, %c0_4] : memref<208x64xf32, #tpu.memory_space<vmem>>, vector<64x64xf32>
    %c144 = arith.constant 144 : index
    %c0_5 = arith.constant 0 : index
    %4 = vector.load %arg2[%c144, %c0_5] : memref<208x64xf32, #tpu.memory_space<vmem>>, vector<64x64xf32>
    %c0_6 = arith.constant 0 : index
    %c0_7 = arith.constant 0 : index
    %5 = vector.load %arg3[%c0_6, %c0_7] : memref<8x64xf32, #tpu.memory_space<vmem>>, vector<1x64xf32>
    %c1 = arith.constant 1 : index
    %c0_8 = arith.constant 0 : index
    %6 = vector.load %arg3[%c1, %c0_8] : memref<8x64xf32, #tpu.memory_space<vmem>>, vector<1x64xf32>
    %c2 = arith.constant 2 : index
    %c0_9 = arith.constant 0 : index
    %7 = vector.load %arg3[%c2, %c0_9] : memref<8x64xf32, #tpu.memory_space<vmem>>, vector<1x64xf32>
    %c3 = arith.constant 3 : index
    %c0_10 = arith.constant 0 : index
    %8 = vector.load %arg3[%c3, %c0_10] : memref<8x64xf32, #tpu.memory_space<vmem>>, vector<1x64xf32>
    %c4 = arith.constant 4 : index
    %c0_11 = arith.constant 0 : index
    %9 = vector.load %arg3[%c4, %c0_11] : memref<8x64xf32, #tpu.memory_space<vmem>>, vector<1x64xf32>
    %c5 = arith.constant 5 : index
    %c0_12 = arith.constant 0 : index
    %10 = vector.load %arg3[%c5, %c0_12] : memref<8x64xf32, #tpu.memory_space<vmem>>, vector<1x64xf32>
    %c6 = arith.constant 6 : index
    %c0_13 = arith.constant 0 : index
    %11 = vector.load %arg3[%c6, %c0_13] : memref<8x64xf32, #tpu.memory_space<vmem>>, vector<1x2xf32>
    %cst = arith.constant dense<0.000000e+00> : vector<8x64xf32>
    %12 = tpu.matmul %0, %1, %cst {dimension_numbers = #tpu.dot_dimension_numbers<[1], [0], [0], [1], [0, 0, 1, 1], [], []>} : vector<8x16xf32>, vector<16x64xf32>, vector<8x64xf32> -> vector<8x64xf32>
    %13 = vector.broadcast %5 : vector<1x64xf32> to vector<8x64xf32>
    %14 = arith.addf %12, %13 : vector<8x64xf32>
    %cst_14 = arith.constant dense<0.000000e+00> : vector<8x64xf32>
    %15 = tpu.matmul %14, %3, %cst_14 {dimension_numbers = #tpu.dot_dimension_numbers<[1], [0], [0], [1], [0, 0, 1, 1], [], []>} : vector<8x64xf32>, vector<64x64xf32>, vector<8x64xf32> -> vector<8x64xf32>
    %16 = arith.mulf %14, %14 : vector<8x64xf32>
    %cst_15 = arith.constant dense<0.000000e+00> : vector<8x64xf32>
    %17 = tpu.matmul %16, %3, %cst_15 {dimension_numbers = #tpu.dot_dimension_numbers<[1], [0], [0], [1], [0, 0, 1, 1], [], []>} : vector<8x64xf32>, vector<64x64xf32>, vector<8x64xf32> -> vector<8x64xf32>
    %18 = arith.mulf %15, %15 : vector<8x64xf32>
    %19 = arith.subf %17, %18 : vector<8x64xf32>
    %20 = arith.subf %14, %15 : vector<8x64xf32>
    %cst_16 = arith.constant 9.99999974E-6 : f32
    %21 = vector.broadcast %cst_16 : f32 to vector<8x64xf32>
    %22 = arith.addf %19, %21 : vector<8x64xf32>
    %23 = math.rsqrt %22 : vector<8x64xf32>
    %24 = arith.mulf %20, %23 : vector<8x64xf32>
    %25 = vector.broadcast %6 : vector<1x64xf32> to vector<8x64xf32>
    %26 = arith.mulf %24, %25 : vector<8x64xf32>
    %27 = vector.broadcast %7 : vector<1x64xf32> to vector<8x64xf32>
    %28 = arith.addf %26, %27 : vector<8x64xf32>
    %cst_17 = arith.constant 0.000000e+00 : f32
    %29 = vector.broadcast %cst_17 : f32 to vector<8x64xf32>
    %30 = arith.maximumf %28, %29 : vector<8x64xf32>
    %cst_18 = arith.constant dense<0.000000e+00> : vector<8x64xf32>
    %31 = tpu.matmul %30, %2, %cst_18 {dimension_numbers = #tpu.dot_dimension_numbers<[1], [0], [0], [1], [0, 0, 1, 1], [], []>} : vector<8x64xf32>, vector<64x64xf32>, vector<8x64xf32> -> vector<8x64xf32>
    %32 = vector.broadcast %8 : vector<1x64xf32> to vector<8x64xf32>
    %33 = arith.addf %31, %32 : vector<8x64xf32>
    %cst_19 = arith.constant dense<0.000000e+00> : vector<8x64xf32>
    %34 = tpu.matmul %33, %3, %cst_19 {dimension_numbers = #tpu.dot_dimension_numbers<[1], [0], [0], [1], [0, 0, 1, 1], [], []>} : vector<8x64xf32>, vector<64x64xf32>, vector<8x64xf32> -> vector<8x64xf32>
    %35 = arith.mulf %33, %33 : vector<8x64xf32>
    %cst_20 = arith.constant dense<0.000000e+00> : vector<8x64xf32>
    %36 = tpu.matmul %35, %3, %cst_20 {dimension_numbers = #tpu.dot_dimension_numbers<[1], [0], [0], [1], [0, 0, 1, 1], [], []>} : vector<8x64xf32>, vector<64x64xf32>, vector<8x64xf32> -> vector<8x64xf32>
    %37 = arith.mulf %34, %34 : vector<8x64xf32>
    %38 = arith.subf %36, %37 : vector<8x64xf32>
    %39 = arith.subf %33, %34 : vector<8x64xf32>
    %cst_21 = arith.constant 9.99999974E-6 : f32
    %40 = vector.broadcast %cst_21 : f32 to vector<8x64xf32>
    %41 = arith.addf %38, %40 : vector<8x64xf32>
    %42 = math.rsqrt %41 : vector<8x64xf32>
    %43 = arith.mulf %39, %42 : vector<8x64xf32>
    %44 = vector.broadcast %9 : vector<1x64xf32> to vector<8x64xf32>
    %45 = arith.mulf %43, %44 : vector<8x64xf32>
    %46 = vector.broadcast %10 : vector<1x64xf32> to vector<8x64xf32>
    %47 = arith.addf %45, %46 : vector<8x64xf32>
    %cst_22 = arith.constant 0.000000e+00 : f32
    %48 = vector.broadcast %cst_22 : f32 to vector<8x64xf32>
    %49 = arith.maximumf %47, %48 : vector<8x64xf32>
    %cst_23 = arith.constant dense<0.000000e+00> : vector<8x64xf32>
    %50 = tpu.matmul %49, %4, %cst_23 {dimension_numbers = #tpu.dot_dimension_numbers<[1], [0], [0], [1], [0, 0, 1, 1], [], []>} : vector<8x64xf32>, vector<64x64xf32>, vector<8x64xf32> -> vector<8x64xf32>
    %51 = vector.extract_strided_slice %50 {offsets = [0, 0], sizes = [8, 2], strides = [1, 1]} : vector<8x64xf32> to vector<8x2xf32>
    %52 = vector.broadcast %11 : vector<1x2xf32> to vector<8x2xf32>
    %53 = arith.addf %51, %52 : vector<8x2xf32>
    %c0_24 = arith.constant 0 : index
    %c0_25 = arith.constant 0 : index
    %54 = vector.load %arg4[%c0_24, %c0_25] : memref<8x2xf32, #tpu.memory_space<vmem>>, vector<8x2xf32>
    tpu.vector_store %arg4[%c0_24, %c0_25], %53 {strides = array<i32>} : memref<8x2xf32, #tpu.memory_space<vmem>>, vector<8x2xf32>,
    return
  }
  func.func @transform_0(%arg0: i32) -> (i32, i32) {
    %c0_i32 = arith.constant 0 : i32
    %c0_i32_0 = arith.constant 0 : i32
    return %arg0, %c0_i32 : i32, i32
  }
  func.func @transform_1(%arg0: i32) -> (i32, i32) {
    %c0_i32 = arith.constant 0 : i32
    %c0_i32_0 = arith.constant 0 : i32
    %c0_i32_1 = arith.constant 0 : i32
    return %c0_i32, %c0_i32_0 : i32, i32
  }
  func.func @transform_2(%arg0: i32) -> (i32, i32) {
    %c0_i32 = arith.constant 0 : i32
    %c0_i32_0 = arith.constant 0 : i32
    %c0_i32_1 = arith.constant 0 : i32
    return %c0_i32, %c0_i32_0 : i32, i32
  }
  func.func @transform_3(%arg0: i32) -> (i32, i32) {
    %c0_i32 = arith.constant 0 : i32
    %c0_i32_0 = arith.constant 0 : i32
    return %arg0, %c0_i32 : i32, i32
  }
}

</mosaic_0001>

<llo_original>
// kernel: tpu_custom_call.1
$region0: #{tpu_custom_call.1}
  #allocation0 [shape = 'u32[]', space=smem, size = 0x4, offset = 0x4, fixed_abs, tag = 'smem constant byte address 0x4 - core index']
  #allocation1 [shape = 'u32[144,128]{1,0:T(1,128)}', space=vmem, size = 0x12000, scoped, tag = 'internal scratch']
  %s0 = inlined_call_operand.vmem [shape: f32[8,16], index: 0, kind: input, shape index: {}]
  %s1 = inlined_call_operand.vmem [shape: f32[208,64], index: 1, kind: input, shape index: {}]
  %s2 = inlined_call_operand.vmem [shape: f32[8,64], index: 2, kind: input, shape index: {}]
  %s3 = inlined_call_operand.vmem [shape: f32[8,2], index: 3, kind: output, shape index: {}]
  %s4 = sld [smem:[#allocation0]]
  $region22: #{tpu_custom_call.1} parent=0
    _
  %s6 = ssub.s32 1, %s4
  %s7 = scalar_select 0, %s6, %s4
  // Predicated region
  $region2: #{tpu_custom_call.1} parent=0 // pred_check
    _
  $region3: #{tpu_custom_call.1} parent=0 // pred_check_branch
    %9 = sbr.rel (0) target = $region5
  $region4: #{tpu_custom_call.1} parent=0 // pred_region
    _
  $region5: #{tpu_custom_call.1} parent=0 // pred_fallthru
    _
  // Predicated region
  $region6: #{tpu_custom_call.1} parent=0 // pred_check
    _
  $region7: #{tpu_custom_call.1} parent=0 // pred_check_branch
    %11 = sbr.rel (0) target = $region9
  $region8: #{tpu_custom_call.1} parent=0 // pred_region
    _
  $region9: #{tpu_custom_call.1} parent=0 // pred_fallthru
    _
  // Predicated region
  $region10: #{tpu_custom_call.1} parent=0 // pred_check
    _
  $region11: #{tpu_custom_call.1} parent=0 // pred_check_branch
    %13 = sbr.rel (0) target = $region13
  $region12: #{tpu_custom_call.1} parent=0 // pred_region
    _
  $region13: #{tpu_custom_call.1} parent=0 // pred_fallthru
    _
  %v14 = vld [vmem:[%s0] sm:$0xff]
  %v15 = vld [vmem:[%s1] sm:$0xff]
  %v16 = vld [vmem:[%s1 + $0x8] sm:$0xff]
  %v17 = vld [vmem:[%s1 + $0x10] sm:$0xff]
  %v18 = vld [vmem:[%s1 + $0x18] sm:$0xff]
  %v19 = vld [vmem:[%s1 + $0x20] sm:$0xff]
  %v20 = vld [vmem:[%s1 + $0x28] sm:$0xff]
  %v21 = vld [vmem:[%s1 + $0x30] sm:$0xff]
  %v22 = vld [vmem:[%s1 + $0x38] sm:$0xff]
  %v23 = vld [vmem:[%s1 + $0x40] sm:$0xff]
  %v24 = vld [vmem:[%s1 + $0x48] sm:$0xff]
  %v25 = vld [vmem:[%s1 + $0x50] sm:$0xff]
  %v26 = vld [vmem:[%s1 + $0x58] sm:$0xff]
  %v27 = vld [vmem:[%s1 + $0x60] sm:$0xff]
  %v28 = vld [vmem:[%s1 + $0x68] sm:$0xff]
  %v29 = vld [vmem:[%s1 + $0x70] sm:$0xff]
  %v30 = vld [vmem:[%s1 + $0x78] sm:$0xff]
  %v31 = vld [vmem:[%s1 + $0x80] sm:$0xff]
  %v32 = vld [vmem:[%s1 + $0x88] sm:$0xff]
  %v33 = vld [vmem:[%s1 + $0x90] sm:$0xff]
  %v34 = vld [vmem:[%s1 + $0x98] sm:$0xff]
  %v35 = vld [vmem:[%s1 + $0xa0] sm:$0xff]
  %v36 = vld [vmem:[%s1 + $0xa8] sm:$0xff]
  %v37 = vld [vmem:[%s1 + $0xb0] sm:$0xff]
  %v38 = vld [vmem:[%s1 + $0xb8] sm:$0xff]
  %v39 = vld [vmem:[%s1 + $0xc0] sm:$0xff]
  %v40 = vld [vmem:[%s1 + $0xc8] sm:$0xff]
  %v41 = vld [vmem:[%s2] sm:$0x1]
  %v42 = vld [vmem:[%s2 + $0x1] sm:$0x1]
  %v43 = vld [vmem:[%s2 + $0x2] sm:$0x1]
  %v44 = vld [vmem:[%s2 + $0x3] sm:$0x1]
  %v45 = vld [vmem:[%s2 + $0x4] sm:$0x1]
  %v46 = vld [vmem:[%s2 + $0x5] sm:$0x1]
  %v47 = vld [vmem:[%s2 + $0x6] sm:$0x1]
  %v48 = vlaneseq
  %v49 = vshrl.u32 %v48, 7
  %v50 = vsub.s32 0, %v49
  %v51 = vrot.slane %v41, %v50
  %vm52 = vcmask 130048
  %v54 = vsel %vm52, %v14, 0
  %56 = vmatprep.subr.mxu0 0.0
  %57 = vmatpush1.msra.mxu0 %v15
  %58 = vmatprep.subr.mxu0 0.0
  %59 = vmatpush1.msra.mxu0 %v16
  %60 = vmatprep.subr.mxu0 0.0
  %61 = vmatpush1.msra.mxu0 0.0
  %62 = vmatprep.subr.mxu0 0.0
  %63 = vmatpush1.msra.mxu0 0.0
  %64 = vmatprep.subr.mxu0 0.0
  %65 = vmatpush1.msra.mxu0 0.0
  %66 = vmatprep.subr.mxu0 0.0
  %67 = vmatpush1.msra.mxu0 0.0
  %68 = vmatprep.subr.mxu0 0.0
  %69 = vmatpush1.msra.mxu0 0.0
  %70 = vmatprep.subr.mxu0 0.0
  %71 = vmatpush1.msra.mxu0 0.0
  %72 = vmatprep.subr.mxu0 0.0
  %73 = vmatpush1.msra.mxu0 0.0
  %74 = vmatprep.subr.mxu0 0.0
  %75 = vmatpush1.msra.mxu0 0.0
  %76 = vmatprep.subr.mxu0 0.0
  %77 = vmatpush1.msra.mxu0 0.0
  %78 = vmatprep.subr.mxu0 0.0
  %79 = vmatpush1.msra.mxu0 0.0
  %80 = vmatprep.subr.mxu0 0.0
  %81 = vmatpush1.msra.mxu0 0.0
  %82 = vmatprep.subr.mxu0 0.0
  %83 = vmatpush1.msra.mxu0 0.0
  %84 = vmatprep.subr.mxu0 0.0
  %85 = vmatpush1.msra.mxu0 0.0
  %86 = vmatprep.subr.mxu0 0.0
  %87 = vmatpush1.msra.mxu0 0.0
  %88 = vmatprep.subr.mxu0 0.0
  %89 = vmatpush1.msra.mxu0 0.0
  %90 = vmatprep.subr.mxu0 0.0
  %91 = vmatpush1.msra.mxu0 0.0
  %92 = vmatprep.subr.mxu0 0.0
  %93 = vmatpush1.msra.mxu0 0.0
  %94 = vmatprep.subr.mxu0 0.0
  %95 = vmatpush1.msra.mxu0 0.0
  %96 = vmatprep.subr.mxu0 0.0
  %97 = vmatpush1.msra.mxu0 0.0
  %98 = vmatprep.subr.mxu0 0.0
  %99 = vmatpush1.msra.mxu0 0.0
  %100 = vmatprep.subr.mxu0 0.0
  %101 = vmatpush1.msra.mxu0 0.0
  %102 = vmatprep.subr.mxu0 0.0
  %103 = vmatpush1.msra.mxu0 0.0
  %104 = vmatprep.subr.mxu0 0.0
  %105 = vmatpush1.msra.mxu0 0.0
  %106 = vmatprep.subr.mxu0 0.0
  %107 = vmatpush1.msra.mxu0 0.0
  %108 = vmatprep.subr.mxu0 0.0
  %109 = vmatpush1.msra.mxu0 0.0
  %110 = vmatprep.subr.mxu0 0.0
  %111 = vmatpush1.msra.mxu0 0.0
  %112 = vmatprep.subr.mxu0 0.0
  %113 = vmatpush1.msra.mxu0 0.0
  %114 = vmatprep.subr.mxu0 0.0
  %115 = vmatpush1.msra.mxu0 0.0
  %116 = vmatprep.subr.mxu0 0.0
  %117 = vmatpush1.msra.mxu0 0.0
  %118 = vmatprep.subr.mxu0 0.0
  %119 = vmatpush1.msra.mxu0 0.0
  %120 = vmatprep.mubr.f32.mxu0 0.0
  %121 = vmatmul.mubr.f32.gmra.mrb[0].mxu0 %v54
  %v122 = vpop.f32.mrb[0].mxu0
  %v123 = vadd.f32 %v51, %v122
  %v124 = vpop.f32.mrb[0].mxu0
  %125 = vdwg.mxu0
  %vm126 = vcmask 523264
  %v128 = vsel %vm126, %v123, 0
  %130 = vmatprep.subr.mxu0 0.0
  %131 = vmatpush1.msra.mxu0 %v25
  %132 = vmatprep.subr.mxu0 0.0
  %133 = vmatpush1.msra.mxu0 %v26
  %134 = vmatprep.subr.mxu0 0.0
  %135 = vmatpush1.msra.mxu0 %v27
  %136 = vmatprep.subr.mxu0 0.0
  %137 = vmatpush1.msra.mxu0 %v28
  %138 = vmatprep.subr.mxu0 0.0
  %139 = vmatpush1.msra.mxu0 %v29
  %140 = vmatprep.subr.mxu0 0.0
  %141 = vmatpush1.msra.mxu0 %v30
  %142 = vmatprep.subr.mxu0 0.0
  %143 = vmatpush1.msra.mxu0 %v31
  %144 = vmatprep.subr.mxu0 0.0
  %145 = vmatpush1.msra.mxu0 %v32
  %146 = vmatprep.subr.mxu0 0.0
  %147 = vmatpush1.msra.mxu0 0.0
  %148 = vmatprep.subr.mxu0 0.0
  %149 = vmatpush1.msra.mxu0 0.0
  %150 = vmatprep.subr.mxu0 0.0
  %151 = vmatpush1.msra.mxu0 0.0
  %152 = vmatprep.subr.mxu0 0.0
  %153 = vmatpush1.msra.mxu0 0.0
  %154 = vmatprep.subr.mxu0 0.0
  %155 = vmatpush1.msra.mxu0 0.0
  %156 = vmatprep.subr.mxu0 0.0
  %157 = vmatpush1.msra.mxu0 0.0
  %158 = vmatprep.subr.mxu0 0.0
  %159 = vmatpush1.msra.mxu0 0.0
  %160 = vmatprep.subr.mxu0 0.0
  %161 = vmatpush1.msra.mxu0 0.0
  %162 = vmatprep.subr.mxu0 0.0
  %163 = vmatpush1.msra.mxu0 0.0
  %164 = vmatprep.subr.mxu0 0.0
  %165 = vmatpush1.msra.mxu0 0.0
  %166 = vmatprep.subr.mxu0 0.0
  %167 = vmatpush1.msra.mxu0 0.0
  %168 = vmatprep.subr.mxu0 0.0
  %169 = vmatpush1.msra.mxu0 0.0
  %170 = vmatprep.subr.mxu0 0.0
  %171 = vmatpush1.msra.mxu0 0.0
  %172 = vmatprep.subr.mxu0 0.0
  %173 = vmatpush1.msra.mxu0 0.0
  %174 = vmatprep.subr.mxu0 0.0
  %175 = vmatpush1.msra.mxu0 0.0
  %176 = vmatprep.subr.mxu0 0.0
  %177 = vmatpush1.msra.mxu0 0.0
  %178 = vmatprep.subr.mxu0 0.0
  %179 = vmatpush1.msra.mxu0 0.0
  %180 = vmatprep.subr.mxu0 0.0
  %181 = vmatpush1.msra.mxu0 0.0
  %182 = vmatprep.subr.mxu0 0.0
  %183 = vmatpush1.msra.mxu0 0.0
  %184 = vmatprep.subr.mxu0 0.0
  %185 = vmatpush1.msra.mxu0 0.0
  %186 = vmatprep.subr.mxu0 0.0
  %187 = vmatpush1.msra.mxu0 0.0
  %188 = vmatprep.subr.mxu0 0.0
  %189 = vmatpush1.msra.mxu0 0.0
  %190 = vmatprep.subr.mxu0 0.0
  %191 = vmatpush1.msra.mxu0 0.0
  %192 = vmatprep.subr.mxu0 0.0
  %193 = vmatpush1.msra.mxu0 0.0
  %194 = vmatprep.mubr.f32.mxu0 0.0
  %195 = vmatmul.mubr.f32.gmra.mrb[0].mxu0 %v128
  %v196 = vpop.f32.mrb[0].mxu0
  %v197 = vadd.f32 0.0, %v196
  %v198 = vpop.f32.mrb[0].mxu0
  %199 = vdwg.mxu0
  %v200 = vmul.f32 %v123, %v123
  %v202 = vsel %vm126, %v200, 0
  %204 = vmatprep.subr.mxu0 0.0
  %205 = vmatpush1.msra.mxu0 %v25
  %206 = vmatprep.subr.mxu0 0.0
  %207 = vmatpush1.msra.mxu0 %v26
  %208 = vmatprep.subr.mxu0 0.0
  %209 = vmatpush1.msra.mxu0 %v27
  %210 = vmatprep.subr.mxu0 0.0
  %211 = vmatpush1.msra.mxu0 %v28
  %212 = vmatprep.subr.mxu0 0.0
  %213 = vmatpush1.msra.mxu0 %v29
  %214 = vmatprep.subr.mxu0 0.0
  %215 = vmatpush1.msra.mxu0 %v30
  %216 = vmatprep.subr.mxu0 0.0
  %217 = vmatpush1.msra.mxu0 %v31
  %218 = vmatprep.subr.mxu0 0.0
  %219 = vmatpush1.msra.mxu0 %v32
  %220 = vmatprep.subr.mxu0 0.0
  %221 = vmatpush1.msra.mxu0 0.0
  %222 = vmatprep.subr.mxu0 0.0
  %223 = vmatpush1.msra.mxu0 0.0
  %224 = vmatprep.subr.mxu0 0.0
  %225 = vmatpush1.msra.mxu0 0.0
  %226 = vmatprep.subr.mxu0 0.0
  %227 = vmatpush1.msra.mxu0 0.0
  %228 = vmatprep.subr.mxu0 0.0
  %229 = vmatpush1.msra.mxu0 0.0
  %230 = vmatprep.subr.mxu0 0.0
  %231 = vmatpush1.msra.mxu0 0.0
  %232 = vmatprep.subr.mxu0 0.0
  %233 = vmatpush1.msra.mxu0 0.0
  %234 = vmatprep.subr.mxu0 0.0
  %235 = vmatpush1.msra.mxu0 0.0
  %236 = vmatprep.subr.mxu0 0.0
  %237 = vmatpush1.msra.mxu0 0.0
  %238 = vmatprep.subr.mxu0 0.0
  %239 = vmatpush1.msra.mxu0 0.0
  %240 = vmatprep.subr.mxu0 0.0
  %241 = vmatpush1.msra.mxu0 0.0
  %242 = vmatprep.subr.mxu0 0.0
  %243 = vmatpush1.msra.mxu0 0.0
  %244 = vmatprep.subr.mxu0 0.0
  %245 = vmatpush1.msra.mxu0 0.0
  %246 = vmatprep.subr.mxu0 0.0
  %247 = vmatpush1.msra.mxu0 0.0
  %248 = vmatprep.subr.mxu0 0.0
  %249 = vmatpush1.msra.mxu0 0.0
  %250 = vmatprep.subr.mxu0 0.0
  %251 = vmatpush1.msra.mxu0 0.0
  %252 = vmatprep.subr.mxu0 0.0
  %253 = vmatpush1.msra.mxu0 0.0
  %254 = vmatprep.subr.mxu0 0.0
  %255 = vmatpush1.msra.mxu0 0.0
  %256 = vmatprep.subr.mxu0 0.0
  %257 = vmatpush1.msra.mxu0 0.0
  %258 = vmatprep.subr.mxu0 0.0
  %259 = vmatpush1.msra.mxu0 0.0
  %260 = vmatprep.subr.mxu0 0.0
  %261 = vmatpush1.msra.mxu0 0.0
  %262 = vmatprep.subr.mxu0 0.0
  %263 = vmatpush1.msra.mxu0 0.0
  %264 = vmatprep.subr.mxu0 0.0
  %265 = vmatpush1.msra.mxu0 0.0
  %266 = vmatprep.subr.mxu0 0.0
  %267 = vmatpush1.msra.mxu0 0.0
  %268 = vmatprep.mubr.f32.mxu0 0.0
  %269 = vmatmul.mubr.f32.gmra.mrb[0].mxu0 %v202
  %v270 = vpop.f32.mrb[0].mxu0
  %v271 = vadd.f32 0.0, %v270
  %v272 = vpop.f32.mrb[0].mxu0
  %273 = vdwg.mxu0
  %v274 = vmul.f32 %v197, %v197
  %v275 = vsub.f32 %v271, %v274
  %v276 = vsub.f32 %v123, %v197
  %v277 = vadd.f32 %v275, 1e-05
  %v278 = vrsqrt.pop %v277
  %v279 = vmul.f32 %v276, %v278
  %v280 = vlaneseq
  %v281 = vshrl.u32 %v280, 7
  %v282 = vsub.s32 0, %v281
  %v283 = vrot.slane %v42, %v282
  %v284 = vmul.f32 %v279, %v283
  %v285 = vlaneseq
  %v286 = vshrl.u32 %v285, 7
  %v287 = vsub.s32 0, %v286
  %v288 = vrot.slane %v43, %v287
  %v289 = vadd.f32 %v284, %v288
  %v290 = vmax.f32 %v289, 0.0
  %v291 = vlaneseq
  %v292 = vshrl.u32 %v291, 7
  %v293 = vsub.s32 0, %v292
  %v294 = vrot.slane %v44, %v293
  %v296 = vsel %vm126, %v290, 0
  %298 = vmatprep.subr.mxu0 0.0
  %299 = vmatpush1.msra.mxu0 %v17
  %300 = vmatprep.subr.mxu0 0.0
  %301 = vmatpush1.msra.mxu0 %v18
  %302 = vmatprep.subr.mxu0 0.0
  %303 = vmatpush1.msra.mxu0 %v19
  %304 = vmatprep.subr.mxu0 0.0
  %305 = vmatpush1.msra.mxu0 %v20
  %306 = vmatprep.subr.mxu0 0.0
  %307 = vmatpush1.msra.mxu0 %v21
  %308 = vmatprep.subr.mxu0 0.0
  %309 = vmatpush1.msra.mxu0 %v22
  %310 = vmatprep.subr.mxu0 0.0
  %311 = vmatpush1.msra.mxu0 %v23
  %312 = vmatprep.subr.mxu0 0.0
  %313 = vmatpush1.msra.mxu0 %v24
  %314 = vmatprep.subr.mxu0 0.0
  %315 = vmatpush1.msra.mxu0 0.0
  %316 = vmatprep.subr.mxu0 0.0
  %317 = vmatpush1.msra.mxu0 0.0
  %318 = vmatprep.subr.mxu0 0.0
  %319 = vmatpush1.msra.mxu0 0.0
  %320 = vmatprep.subr.mxu0 0.0
  %321 = vmatpush1.msra.mxu0 0.0
  %322 = vmatprep.subr.mxu0 0.0
  %323 = vmatpush1.msra.mxu0 0.0
  %324 = vmatprep.subr.mxu0 0.0
  %325 = vmatpush1.msra.mxu0 0.0
  %326 = vmatprep.subr.mxu0 0.0
  %327 = vmatpush1.msra.mxu0 0.0
  %328 = vmatprep.subr.mxu0 0.0
  %329 = vmatpush1.msra.mxu0 0.0
  %330 = vmatprep.subr.mxu0 0.0
  %331 = vmatpush1.msra.mxu0 0.0
  %332 = vmatprep.subr.mxu0 0.0
  %333 = vmatpush1.msra.mxu0 0.0
  %334 = vmatprep.subr.mxu0 0.0
  %335 = vmatpush1.msra.mxu0 0.0
  %336 = vmatprep.subr.mxu0 0.0
  %337 = vmatpush1.msra.mxu0 0.0
  %338 = vmatprep.subr.mxu0 0.0
  %339 = vmatpush1.msra.mxu0 0.0
  %340 = vmatprep.subr.mxu0 0.0
  %341 = vmatpush1.msra.mxu0 0.0
  %342 = vmatprep.subr.mxu0 0.0
  %343 = vmatpush1.msra.mxu0 0.0
  %344 = vmatprep.subr.mxu0 0.0
  %345 = vmatpush1.msra.mxu0 0.0
  %346 = vmatprep.subr.mxu0 0.0
  %347 = vmatpush1.msra.mxu0 0.0
  %348 = vmatprep.subr.mxu0 0.0
  %349 = vmatpush1.msra.mxu0 0.0
  %350 = vmatprep.subr.mxu0 0.0
  %351 = vmatpush1.msra.mxu0 0.0
  %352 = vmatprep.subr.mxu0 0.0
  %353 = vmatpush1.msra.mxu0 0.0
  %354 = vmatprep.subr.mxu0 0.0
  %355 = vmatpush1.msra.mxu0 0.0
  %356 = vmatprep.subr.mxu0 0.0
  %357 = vmatpush1.msra.mxu0 0.0
  %358 = vmatprep.subr.mxu0 0.0
  %359 = vmatpush1.msra.mxu0 0.0
  %360 = vmatprep.subr.mxu0 0.0
  %361 = vmatpush1.msra.mxu0 0.0
  %362 = vmatprep.mubr.f32.mxu0 0.0
  %363 = vmatmul.mubr.f32.gmra.mrb[0].mxu0 %v296
  %v364 = vpop.f32.mrb[0].mxu0
  %v365 = vadd.f32 %v294, %v364
  %v366 = vpop.f32.mrb[0].mxu0
  %367 = vdwg.mxu0
  %v369 = vsel %vm126, %v365, 0
  %371 = vmatprep.subr.mxu0 0.0
  %372 = vmatpush1.msra.mxu0 %v25
  %373 = vmatprep.subr.mxu0 0.0
  %374 = vmatpush1.msra.mxu0 %v26
  %375 = vmatprep.subr.mxu0 0.0
  %376 = vmatpush1.msra.mxu0 %v27
  %377 = vmatprep.subr.mxu0 0.0
  %378 = vmatpush1.msra.mxu0 %v28
  %379 = vmatprep.subr.mxu0 0.0
  %380 = vmatpush1.msra.mxu0 %v29
  %381 = vmatprep.subr.mxu0 0.0
  %382 = vmatpush1.msra.mxu0 %v30
  %383 = vmatprep.subr.mxu0 0.0
  %384 = vmatpush1.msra.mxu0 %v31
  %385 = vmatprep.subr.mxu0 0.0
  %386 = vmatpush1.msra.mxu0 %v32
  %387 = vmatprep.subr.mxu0 0.0
  %388 = vmatpush1.msra.mxu0 0.0
  %389 = vmatprep.subr.mxu0 0.0
  %390 = vmatpush1.msra.mxu0 0.0
  %391 = vmatprep.subr.mxu0 0.0
  %392 = vmatpush1.msra.mxu0 0.0
  %393 = vmatprep.subr.mxu0 0.0
  %394 = vmatpush1.msra.mxu0 0.0
  %395 = vmatprep.subr.mxu0 0.0
  %396 = vmatpush1.msra.mxu0 0.0
  %397 = vmatprep.subr.mxu0 0.0
  %398 = vmatpush1.msra.mxu0 0.0
  %399 = vmatprep.subr.mxu0 0.0
  %400 = vmatpush1.msra.mxu0 0.0
  %401 = vmatprep.subr.mxu0 0.0
  %402 = vmatpush1.msra.mxu0 0.0
  %403 = vmatprep.subr.mxu0 0.0
  %404 = vmatpush1.msra.mxu0 0.0
  %405 = vmatprep.subr.mxu0 0.0
  %406 = vmatpush1.msra.mxu0 0.0
  %407 = vmatprep.subr.mxu0 0.0
  %408 = vmatpush1.msra.mxu0 0.0
  %409 = vmatprep.subr.mxu0 0.0
  %410 = vmatpush1.msra.mxu0 0.0
  %411 = vmatprep.subr.mxu0 0.0
  %412 = vmatpush1.msra.mxu0 0.0
  %413 = vmatprep.subr.mxu0 0.0
  %414 = vmatpush1.msra.mxu0 0.0
  %415 = vmatprep.subr.mxu0 0.0
  %416 = vmatpush1.msra.mxu0 0.0
  %417 = vmatprep.subr.mxu0 0.0
  %418 = vmatpush1.msra.mxu0 0.0
  %419 = vmatprep.subr.mxu0 0.0
  %420 = vmatpush1.msra.mxu0 0.0
  %421 = vmatprep.subr.mxu0 0.0
  %422 = vmatpush1.msra.mxu0 0.0
  %423 = vmatprep.subr.mxu0 0.0
  %424 = vmatpush1.msra.mxu0 0.0
  %425 = vmatprep.subr.mxu0 0.0
  %426 = vmatpush1.msra.mxu0 0.0
  %427 = vmatprep.subr.mxu0 0.0
  %428 = vmatpush1.msra.mxu0 0.0
  %429 = vmatprep.subr.mxu0 0.0
  %430 = vmatpush1.msra.mxu0 0.0
  %431 = vmatprep.subr.mxu0 0.0
  %432 = vmatpush1.msra.mxu0 0.0
  %433 = vmatprep.subr.mxu0 0.0
  %434 = vmatpush1.msra.mxu0 0.0
  %435 = vmatprep.mubr.f32.mxu0 0.0
  %436 = vmatmul.mubr.f32.gmra.mrb[0].mxu0 %v369
  %v437 = vpop.f32.mrb[0].mxu0
  %v438 = vadd.f32 0.0, %v437
  %v439 = vpop.f32.mrb[0].mxu0
  %440 = vdwg.mxu0
  %v441 = vmul.f32 %v365, %v365
  %v443 = vsel %vm126, %v441, 0
  %445 = vmatprep.subr.mxu0 0.0
  %446 = vmatpush1.msra.mxu0 %v25
  %447 = vmatprep.subr.mxu0 0.0
  %448 = vmatpush1.msra.mxu0 %v26
  %449 = vmatprep.subr.mxu0 0.0
  %450 = vmatpush1.msra.mxu0 %v27
  %451 = vmatprep.subr.mxu0 0.0
  %452 = vmatpush1.msra.mxu0 %v28
  %453 = vmatprep.subr.mxu0 0.0
  %454 = vmatpush1.msra.mxu0 %v29
  %455 = vmatprep.subr.mxu0 0.0
  %456 = vmatpush1.msra.mxu0 %v30
  %457 = vmatprep.subr.mxu0 0.0
  %458 = vmatpush1.msra.mxu0 %v31
  %459 = vmatprep.subr.mxu0 0.0
  %460 = vmatpush1.msra.mxu0 %v32
  %461 = vmatprep.subr.mxu0 0.0
  %462 = vmatpush1.msra.mxu0 0.0
  %463 = vmatprep.subr.mxu0 0.0
  %464 = vmatpush1.msra.mxu0 0.0
  %465 = vmatprep.subr.mxu0 0.0
  %466 = vmatpush1.msra.mxu0 0.0
  %467 = vmatprep.subr.mxu0 0.0
  %468 = vmatpush1.msra.mxu0 0.0
  %469 = vmatprep.subr.mxu0 0.0
  %470 = vmatpush1.msra.mxu0 0.0
  %471 = vmatprep.subr.mxu0 0.0
  %472 = vmatpush1.msra.mxu0 0.0
  %473 = vmatprep.subr.mxu0 0.0
  %474 = vmatpush1.msra.mxu0 0.0
  %475 = vmatprep.subr.mxu0 0.0
  %476 = vmatpush1.msra.mxu0 0.0
  %477 = vmatprep.subr.mxu0 0.0
  %478 = vmatpush1.msra.mxu0 0.0
  %479 = vmatprep.subr.mxu0 0.0
  %480 = vmatpush1.msra.mxu0 0.0
  %481 = vmatprep.subr.mxu0 0.0
  %482 = vmatpush1.msra.mxu0 0.0
  %483 = vmatprep.subr.mxu0 0.0
  %484 = vmatpush1.msra.mxu0 0.0
  %485 = vmatprep.subr.mxu0 0.0
  %486 = vmatpush1.msra.mxu0 0.0
  %487 = vmatprep.subr.mxu0 0.0
  %488 = vmatpush1.msra.mxu0 0.0
  %489 = vmatprep.subr.mxu0 0.0
  %490 = vmatpush1.msra.mxu0 0.0
  %491 = vmatprep.subr.mxu0 0.0
  %492 = vmatpush1.msra.mxu0 0.0
  %493 = vmatprep.subr.mxu0 0.0
  %494 = vmatpush1.msra.mxu0 0.0
  %495 = vmatprep.subr.mxu0 0.0
  %496 = vmatpush1.msra.mxu0 0.0
  %497 = vmatprep.subr.mxu0 0.0
  %498 = vmatpush1.msra.mxu0 0.0
  %499 = vmatprep.subr.mxu0 0.0
  %500 = vmatpush1.msra.mxu0 0.0
  %501 = vmatprep.subr.mxu0 0.0
  %502 = vmatpush1.msra.mxu0 0.0
  %503 = vmatprep.subr.mxu0 0.0
  %504 = vmatpush1.msra.mxu0 0.0
  %505 = vmatprep.subr.mxu0 0.0
  %506 = vmatpush1.msra.mxu0 0.0
  %507 = vmatprep.subr.mxu0 0.0
  %508 = vmatpush1.msra.mxu0 0.0
  %509 = vmatprep.mubr.f32.mxu0 0.0
  %510 = vmatmul.mubr.f32.gmra.mrb[0].mxu0 %v443
  %v511 = vpop.f32.mrb[0].mxu0
  %v512 = vadd.f32 0.0, %v511
  %v513 = vpop.f32.mrb[0].mxu0
  %514 = vdwg.mxu0
  %v515 = vmul.f32 %v438, %v438
  %v516 = vsub.f32 %v512, %v515
  %v517 = vsub.f32 %v365, %v438
  %v518 = vadd.f32 %v516, 1e-05
  %v519 = vrsqrt.pop %v518
  %v520 = vmul.f32 %v517, %v519
  %v521 = vlaneseq
  %v522 = vshrl.u32 %v521, 7
  %v523 = vsub.s32 0, %v522
  %v524 = vrot.slane %v45, %v523
  %v525 = vmul.f32 %v520, %v524
  %v526 = vlaneseq
  %v527 = vshrl.u32 %v526, 7
  %v528 = vsub.s32 0, %v527
  %v529 = vrot.slane %v46, %v528
  %v530 = vadd.f32 %v525, %v529
  %v531 = vmax.f32 %v530, 0.0
  %v533 = vsel %vm126, %v531, 0
  %535 = vmatprep.subr.mxu0 0.0
  %536 = vmatpush1.msra.mxu0 %v33
  %537 = vmatprep.subr.mxu0 0.0
  %538 = vmatpush1.msra.mxu0 %v34
  %539 = vmatprep.subr.mxu0 0.0
  %540 = vmatpush1.msra.mxu0 %v35
  %541 = vmatprep.subr.mxu0 0.0
  %542 = vmatpush1.msra.mxu0 %v36
  %543 = vmatprep.subr.mxu0 0.0
  %544 = vmatpush1.msra.mxu0 %v37
  %545 = vmatprep.subr.mxu0 0.0
  %546 = vmatpush1.msra.mxu0 %v38
  %547 = vmatprep.subr.mxu0 0.0
  %548 = vmatpush1.msra.mxu0 %v39
  %549 = vmatprep.subr.mxu0 0.0
  %550 = vmatpush1.msra.mxu0 %v40
  %551 = vmatprep.subr.mxu0 0.0
  %552 = vmatpush1.msra.mxu0 0.0
  %553 = vmatprep.subr.mxu0 0.0
  %554 = vmatpush1.msra.mxu0 0.0
  %555 = vmatprep.subr.mxu0 0.0
  %556 = vmatpush1.msra.mxu0 0.0
  %557 = vmatprep.subr.mxu0 0.0
  %558 = vmatpush1.msra.mxu0 0.0
  %559 = vmatprep.subr.mxu0 0.0
  %560 = vmatpush1.msra.mxu0 0.0
  %561 = vmatprep.subr.mxu0 0.0
  %562 = vmatpush1.msra.mxu0 0.0
  %563 = vmatprep.subr.mxu0 0.0
  %564 = vmatpush1.msra.mxu0 0.0
  %565 = vmatprep.subr.mxu0 0.0
  %566 = vmatpush1.msra.mxu0 0.0
  %567 = vmatprep.subr.mxu0 0.0
  %568 = vmatpush1.msra.mxu0 0.0
  %569 = vmatprep.subr.mxu0 0.0
  %570 = vmatpush1.msra.mxu0 0.0
  %571 = vmatprep.subr.mxu0 0.0
  %572 = vmatpush1.msra.mxu0 0.0
  %573 = vmatprep.subr.mxu0 0.0
  %574 = vmatpush1.msra.mxu0 0.0
  %575 = vmatprep.subr.mxu0 0.0
  %576 = vmatpush1.msra.mxu0 0.0
  %577 = vmatprep.subr.mxu0 0.0
  %578 = vmatpush1.msra.mxu0 0.0
  %579 = vmatprep.subr.mxu0 0.0
  %580 = vmatpush1.msra.mxu0 0.0
  %581 = vmatprep.subr.mxu0 0.0
  %582 = vmatpush1.msra.mxu0 0.0
  %583 = vmatprep.subr.mxu0 0.0
  %584 = vmatpush1.msra.mxu0 0.0
  %585 = vmatprep.subr.mxu0 0.0
  %586 = vmatpush1.msra.mxu0 0.0
  %587 = vmatprep.subr.mxu0 0.0
  %588 = vmatpush1.msra.mxu0 0.0
  %589 = vmatprep.subr.mxu0 0.0
  %590 = vmatpush1.msra.mxu0 0.0
  %591 = vmatprep.subr.mxu0 0.0
  %592 = vmatpush1.msra.mxu0 0.0
  %593 = vmatprep.subr.mxu0 0.0
  %594 = vmatpush1.msra.mxu0 0.0
  %595 = vmatprep.subr.mxu0 0.0
  %596 = vmatpush1.msra.mxu0 0.0
  %597 = vmatprep.subr.mxu0 0.0
  %598 = vmatpush1.msra.mxu0 0.0
  %599 = vmatprep.mubr.f32.mxu0 0.0
  %600 = vmatmul.mubr.f32.gmra.mrb[0].mxu0 %v533
  %v601 = vpop.f32.mrb[0].mxu0
  %v602 = vadd.f32 0.0, %v601
  %v603 = vpop.f32.mrb[0].mxu0
  %604 = vdwg.mxu0
  %v605 = vlaneseq
  %v606 = vshrl.u32 %v605, 7
  %v607 = vsub.s32 0, %v606
  %v608 = vrot.slane %v47, %v607
  %v609 = vadd.f32 %v602, %v608
  %vm610 = vcmask 15360
  %611 = vst.msk [vmem:[%s3] sm:$0xff] %vm610, %v609
  // Predicated region
  $region14: #{tpu_custom_call.1} parent=0 // pred_check
    _
  $region15: #{tpu_custom_call.1} parent=0 // pred_check_branch
    %613 = sbr.rel (0) target = $region17
  $region16: #{tpu_custom_call.1} parent=0 // pred_region
    _
  $region17: #{tpu_custom_call.1} parent=0 // pred_fallthru
    _
  // Predicated region
  $region18: #{tpu_custom_call.1} parent=0 // pred_check
    _
  $region19: #{tpu_custom_call.1} parent=0 // pred_check_branch
    %615 = sbr.rel (0) target = $region21
  $region20: #{tpu_custom_call.1} parent=0 // pred_region
    _
  $region21: #{tpu_custom_call.1} parent=0 // pred_fallthru
    _

</llo_original>
